<compile_context>
chip_gen: v6e
topology: v6e:2x2x1
jax: 0.10.0
libtpu: 0.0.40
codegen_flags: <defaults>
</compile_context>

<pallas_src>
import functools
import math

import jax
import jax.numpy as jnp
from jax.experimental import pallas as pl
from jax.experimental.pallas import tpu as pltpu


_BLOCK_TARGET_BYTES = 2 * 1024 * 1024      # aim for ~2 MiB (in+out) per grid step
_MAX_TRAIL_BLOCK_BYTES = 8 * 1024 * 1024   # fall back if one trailing block is bigger
_MIN_PALLAS_BYTES_DEFAULT = 16 * 1024      # below this, XLA's native pad wins


def _collapse_unpadded_runs(shape, pads):
    """Merge runs of consecutive unpadded axes into one axis (lane density)."""
    new_shape, new_pads = [], []
    i, n = 0, len(shape)
    while i < n:
        lo, hi = pads[i]
        if lo == 0 and hi == 0:
            prod = shape[i]
            i += 1
            while i < n and pads[i] == (0, 0):
                prod *= shape[i]
                i += 1
            new_shape.append(prod)
            new_pads.append((0, 0))
        else:
            new_shape.append(shape[i])
            new_pads.append((lo, hi))
            i += 1
    return tuple(new_shape), tuple(new_pads)


def _padnd_kernel(value_ref, x_ref, o_ref, *, trail_pads, lead_interior):
    """Write one padded output block.

    trail_pads    : ((h_lo, h_hi), (w_lo, w_hi)) static pads of the trailing two axes.
    lead_interior : list of (grid_axis, lo, in_size) for padded leading grid axes.
    """
    val = value_ref[0].astype(o_ref.dtype)
    (h_lo, _h_hi), (w_lo, _w_hi) = trail_pads

    def write_block():
        xs, os = x_ref.shape, o_ref.shape
        h_in, w_in = xs[-2], xs[-1]
        h_out, w_out = os[-2], os[-1]
        lead_shape = os[:-2]
        pre = tuple(slice(0, d) for d in lead_shape)

        # Interior: stored exactly once (no double-write of the dominant region).
        o_ref[pre + (slice(h_lo, h_lo + h_in), slice(w_lo, w_lo + w_in))] = x_ref[...]

        # Constant halo slabs: static border slices only.
        if h_lo > 0:  # top rows, full lane width
            o_ref[pre + (slice(0, h_lo), slice(0, w_out))] = jnp.full(
                lead_shape + (h_lo, w_out), val, o_ref.dtype)
        if h_lo + h_in < h_out:  # bottom rows, full lane width
            o_ref[pre + (slice(h_lo + h_in, h_out), slice(0, w_out))] = jnp.full(
                lead_shape + (h_out - h_lo - h_in, w_out), val, o_ref.dtype)
        if w_lo > 0:  # left columns (interior rows only; corners already done)
            o_ref[pre + (slice(h_lo, h_lo + h_in), slice(0, w_lo))] = jnp.full(
                lead_shape + (h_in, w_lo), val, o_ref.dtype)
        if w_lo + w_in < w_out:  # right columns (interior rows only)
            o_ref[pre + (slice(h_lo, h_lo + h_in), slice(w_lo + w_in, w_out))] = jnp.full(
                lead_shape + (h_in, w_out - w_lo - w_in), val, o_ref.dtype)

    if lead_interior:
        # Padded leading axes: decide at runtime whether this block is interior
        # (copy + trailing-halo fill) or a pure constant halo block.
        conds = []
        for axis, lo, in_size in lead_interior:
            pid = pl.program_id(axis)
            conds.append(jnp.logical_and(pid >= lo, pid < lo + in_size))
        is_interior = functools.reduce(jnp.logical_and, conds)

        @pl.when(is_interior)
        def _():
            write_block()

        @pl.when(jnp.logical_not(is_interior))
        def _():
            o_ref[...] = jnp.full(o_ref.shape, val, o_ref.dtype)
    else:
        write_block()


def padnd(x, pad_width, value, *, min_pallas_bytes=_MIN_PALLAS_BYTES_DEFAULT):
    """Forward pass of PadNd: constant-pad `x` by `pad_width` with `value`."""
    x = jnp.asarray(x)
    pad_width = tuple((int(lo), int(hi)) for lo, hi in pad_width)
    if len(pad_width) != x.ndim:
        raise ValueError("pad_width must supply one (lo, hi) pair per axis")
    if any(lo < 0 or hi < 0 for lo, hi in pad_width):
        raise ValueError("negative padding is not supported")

    out_shape = tuple(d + lo + hi for d, (lo, hi) in zip(x.shape, pad_width))
    if all(lo == 0 and hi == 0 for lo, hi in pad_width):
        return x

    itemsize = jnp.dtype(x.dtype).itemsize
    total_bytes = (x.size + math.prod(out_shape)) * itemsize
    floating = jnp.issubdtype(x.dtype, jnp.floating)
    integer = jnp.issubdtype(x.dtype, jnp.integer)

    # ---- canonicalize: merge unpadded runs, ensure >= 3 dims -------------------
    shape_c, pads_c = _collapse_unpadded_runs(x.shape, pad_width)
    while len(shape_c) < 3:
        shape_c = (1,) + shape_c
        pads_c = ((0, 0),) + pads_c
    out_shape_c = tuple(d + lo + hi for d, (lo, hi) in zip(shape_c, pads_c))

    h_in, w_in = shape_c[-2], shape_c[-1]
    h_out, w_out = out_shape_c[-2], out_shape_c[-1]
    trail_block_bytes = (h_in * w_in + h_out * w_out) * itemsize

    # Small tensors (launch overhead dominates), empty arrays, exotic dtypes and
    # oversized trailing blocks go to XLA's native pad.
    # TODO(synk): tile padded trailing axes in-kernel instead of falling back for
    # trailing blocks larger than _MAX_TRAIL_BLOCK_BYTES.
    if (total_bytes < min_pallas_bytes
            or x.size == 0
            or math.prod(out_shape) == 0
            or not (floating or integer)
            or trail_block_bytes > _MAX_TRAIL_BLOCK_BYTES):
        return jnp.pad(x, pad_width, mode="constant",
                       constant_values=jnp.asarray(value, dtype=x.dtype))

    x_c = x.reshape(shape_c)

    lead_shape = shape_c[:-2]
    lead_pads = pads_c[:-2]
    lead_out = out_shape_c[:-2]
    n_lead = len(lead_shape)

    # Block several rows of the innermost *unpadded* leading axis per grid step.
    last_unpadded = lead_pads[-1] == (0, 0)
    if last_unpadded:
        bl = max(1, min(lead_shape[-1], _BLOCK_TARGET_BYTES // max(trail_block_bytes, 1)))
    else:
        bl = 1

    grid = list(lead_out)
    if last_unpadded:
        grid[-1] = pl.cdiv(lead_shape[-1], bl)
    grid = tuple(grid)

    in_block, out_block = [], []
    for j in range(n_lead):
        if j == n_lead - 1 and last_unpadded:
            in_block.append(bl)          # several rows per block (3-D kernel refs)
            out_block.append(bl)
        else:
            in_block.append(None)        # size-1, squeezed out of the kernel refs
            out_block.append(None)
    in_block += [h_in, w_in]             # trailing axes: one full block
    out_block += [h_out, w_out]

    def _index_map(for_input):
        def index_map(*gids):
            idx = []
            for j in range(n_lead):
                g = gids[j]
                lo, hi = lead_pads[j]
                if for_input and (lo or hi):
                    # Halo positions clamp onto a valid input block (data unused).
                    g = jnp.clip(g - lo, 0, lead_shape[j] - 1)
                idx.append(g)
            idx.extend((0, 0))
            return tuple(idx)
        return index_map

    lead_interior = [(j, lo, lead_shape[j])
                     for j, (lo, hi) in enumerate(lead_pads) if lo or hi]

    kernel = functools.partial(
        _padnd_kernel,
        trail_pads=(pads_c[-2], pads_c[-1]),
        lead_interior=lead_interior,
    )

    bl_eff = bl if last_unpadded else 1
    block_bytes = bl_eff * trail_block_bytes
    vmem_limit = int(min(48 * 1024 * 1024, max(8 * 1024 * 1024, 3 * block_bytes)))

    # Pad value passed at runtime via SMEM -> no retrace per distinct value.
    value_arr = jnp.asarray([value], dtype=jnp.float32 if floating else jnp.int32)

    out_c = pl.pallas_call(
        kernel,
        out_shape=jax.ShapeDtypeStruct(out_shape_c, x.dtype),
        grid=grid,
        in_specs=[
            pl.BlockSpec(memory_space=pltpu.MemorySpace.SMEM),   # pad value scalar
            pl.BlockSpec(tuple(in_block), _index_map(for_input=True)),
        ],
        out_specs=pl.BlockSpec(tuple(out_block), _index_map(for_input=False)),
        compiler_params=pltpu.CompilerParams(
            dimension_semantics=("parallel",) * len(grid),
            vmem_limit_bytes=vmem_limit,
        ),
        cost_estimate=pl.CostEstimate(
            flops=0, transcendentals=0, bytes_accessed=int(total_bytes)),
    )(value_arr, x_c)

    return out_c.reshape(out_shape)


# TODO(synk): the custom autograd backward (interior slice of grad_output) is not
# wired up as a jax.custom_vjp; only the forward pass is implemented here.


if __name__ == "__main__":
    key = jax.random.PRNGKey(0)
    k1, k2, k3, k4 = jax.random.split(key, 4)

    def check(x, pad_width, value, **kw):
        y = jax.block_until_ready(padnd(x, pad_width, value, **kw))
        ref = jnp.pad(x, pad_width, mode="constant",
                      constant_values=jnp.asarray(value, dtype=x.dtype))
        assert y.shape == ref.shape, (y.shape, ref.shape)
        assert y.dtype == ref.dtype, (y.dtype, ref.dtype)
        assert bool(jnp.all(y == ref)), "Pallas PadNd output mismatch vs jnp.pad"

    # 1) The module's canonical small NCHW case (forced through the Pallas kernel).
    x1 = jax.random.normal(k1, (2, 4, 16, 16), dtype=jnp.float32)
    check(x1, ((0, 0), (0, 0), (2, 1), (1, 2)), -1.5, min_pallas_bytes=0)

    # 2) Larger case: multi-block pipelined grid with a blocked leading axis and
    #    a partial edge block.
    x2 = jax.random.normal(k2, (8, 16, 64, 128), dtype=jnp.float32)
    check(x2, ((0, 0), (0, 0), (2, 2), (3, 3)), 0.25)

    # 3) Padding on a leading axis: exercises the halo/interior pl.when branch
    #    and the clamped input index_map.
    x3 = jax.random.normal(k3, (4, 8, 32, 16), dtype=jnp.float32)
    check(x3, ((1, 2), (0, 0), (1, 1), (0, 0)), 3.0, min_pallas_bytes=0)

    # 4) Integer dtype + asymmetric trailing pads + padded leading axis.
    x4 = jax.random.randint(k4, (2, 3, 8, 8), minval=-5, maxval=5, dtype=jnp.int32)
    check(x4, ((0, 0), (1, 0), (0, 2), (3, 1)), 7, min_pallas_bytes=0)

    # 5) Tiny 1-D tensor: exercises the size-based dispatch to jnp.pad.
    x5 = jax.random.normal(k1, (8,), dtype=jnp.float32)
    check(x5, ((2, 2),), 0.5)

    print("KERNEL_OK")
</pallas_src>

<mosaic_0001>
module attributes {stable_mosaic.version = 11 : i64} {
  func.func @_padnd_kernel(%arg0: i32, %arg1: memref<1xf32, #tpu.memory_space<smem>>, %arg2: memref<8x16x16xf32, #tpu.memory_space<vmem>>, %arg3: memref<8x19x19xf32, #tpu.memory_space<vmem>>) attributes {dimension_semantics = [#tpu.dimension_semantics<parallel>], iteration_bounds = array<i64: 1>, scalar_prefetch = 0 : i64, scratch_operands = 0 : i64, tpu.core_type = #tpu.core_type<tc>, window_params = [{transform_indices = @transform_0, window_bounds = array<i64: 1>}, {transform_indices = @transform_1, window_bounds = array<i64: 8, 16, 16>}, {transform_indices = @transform_2, window_bounds = array<i64: 8, 19, 19>}]} {
    %c0 = arith.constant 0 : index
    %0 = memref.load %arg1[%c0] : memref<1xf32, #tpu.memory_space<smem>>
    %c0_0 = arith.constant 0 : index
    %c0_1 = arith.constant 0 : index
    %c0_2 = arith.constant 0 : index
    %1 = vector.load %arg2[%c0_0, %c0_1, %c0_2] : memref<8x16x16xf32, #tpu.memory_space<vmem>>, vector<8x16x16xf32>
    %c0_3 = arith.constant 0 : index
    %c2 = arith.constant 2 : index
    %c1 = arith.constant 1 : index
    %2 = vector.load %arg3[%c0_3, %c2, %c1] : memref<8x19x19xf32, #tpu.memory_space<vmem>>, vector<8x16x16xf32>
    tpu.vector_store %arg3[%c0_3, %c2, %c1], %1 {strides = array<i32>} : memref<8x19x19xf32, #tpu.memory_space<vmem>>, vector<8x16x16xf32>,
    %3 = vector.broadcast %0 : f32 to vector<8x2x19xf32>
    %c0_4 = arith.constant 0 : index
    %c0_5 = arith.constant 0 : index
    %c0_6 = arith.constant 0 : index
    %4 = vector.load %arg3[%c0_4, %c0_5, %c0_6] : memref<8x19x19xf32, #tpu.memory_space<vmem>>, vector<8x2x19xf32>
    tpu.vector_store %arg3[%c0_4, %c0_5, %c0_6], %3 {strides = array<i32>} : memref<8x19x19xf32, #tpu.memory_space<vmem>>, vector<8x2x19xf32>,
    %5 = vector.broadcast %0 : f32 to vector<8x1x19xf32>
    %c0_7 = arith.constant 0 : index
    %c18 = arith.constant 18 : index
    %c0_8 = arith.constant 0 : index
    %6 = vector.load %arg3[%c0_7, %c18, %c0_8] : memref<8x19x19xf32, #tpu.memory_space<vmem>>, vector<8x1x19xf32>
    tpu.vector_store %arg3[%c0_7, %c18, %c0_8], %5 {strides = array<i32>} : memref<8x19x19xf32, #tpu.memory_space<vmem>>, vector<8x1x19xf32>,
    %7 = vector.broadcast %0 : f32 to vector<8x16x1xf32>
    %c0_9 = arith.constant 0 : index
    %c2_10 = arith.constant 2 : index
    %c0_11 = arith.constant 0 : index
    %8 = vector.load %arg3[%c0_9, %c2_10, %c0_11] : memref<8x19x19xf32, #tpu.memory_space<vmem>>, vector<8x16x1xf32>
    tpu.vector_store %arg3[%c0_9, %c2_10, %c0_11], %7 {strides = array<i32>} : memref<8x19x19xf32, #tpu.memory_space<vmem>>, vector<8x16x1xf32>,
    %9 = vector.broadcast %0 : f32 to vector<8x16x2xf32>
    %c0_12 = arith.constant 0 : index
    %c2_13 = arith.constant 2 : index
    %c17 = arith.constant 17 : index
    %10 = vector.load %arg3[%c0_12, %c2_13, %c17] : memref<8x19x19xf32, #tpu.memory_space<vmem>>, vector<8x16x2xf32>
    tpu.vector_store %arg3[%c0_12, %c2_13, %c17], %9 {strides = array<i32>} : memref<8x19x19xf32, #tpu.memory_space<vmem>>, vector<8x16x2xf32>,
    return
  }
  func.func @transform_0(%arg0: i32) -> i32 {
    %c0_i32 = arith.constant 0 : i32
    %c0_i32_0 = arith.constant 0 : i32
    return %c0_i32 : i32
  }
  func.func @transform_1(%arg0: i32) -> (i32, i32, i32) {
    %c0_i32 = arith.constant 0 : i32
    %c0_i32_0 = arith.constant 0 : i32
    %c0_i32_1 = arith.constant 0 : i32
    return %arg0, %c0_i32, %c0_i32_0 : i32, i32, i32
  }
  func.func @transform_2(%arg0: i32) -> (i32, i32, i32) {
    %c0_i32 = arith.constant 0 : i32
    %c0_i32_0 = arith.constant 0 : i32
    %c0_i32_1 = arith.constant 0 : i32
    return %arg0, %c0_i32, %c0_i32_0 : i32, i32, i32
  }
}

</mosaic_0001>

<llo_original>
// kernel: tpu_custom_call.1
$region0: #{tpu_custom_call.1}
  #allocation0 [shape = 'u32[]', space=smem, size = 0x4, offset = 0x4, fixed_abs, tag = 'smem constant byte address 0x4 - core index']
  #allocation1 [shape = 'u32[144,128]{1,0:T(1,128)}', space=vmem, size = 0x12000, scoped, tag = 'internal scratch']
  #allocation2 [shape = 'f32[1]{0:T(128)S(6)}', space=smem, size = 0x200, scoped, tag = 'scoped memory for tpu_custom_call.1']
  %s0 = inlined_call_operand.<no memory space> [shape: f32[1], index: 0, kind: input, shape index: {}]
  %s1 = inlined_call_operand.hbm [shape: f32[8,16,16], index: 1, kind: input, shape index: {}]
  %s2 = inlined_call_operand.vmem [shape: f32[8,19,19], index: 2, kind: output, shape index: {}]
  %s3 = sld [smem:[#allocation0]]
  $region22: #{tpu_custom_call.1} parent=0
    _
  %s5 = ssub.s32 1, %s3
  %s6 = scalar_select 0, %s5, %s3
  %7 = sst [smem:[#allocation2]] %s0
  $region1: #{tpu_custom_call.1} parent=0
    #allocation3 [shape = 'u8[65536]{0}', space=vmem, size = 0x10000, scoped, tag = 'input window, operand 1, single buffered']
    #allocation4 [shape = 's32[1]{0}', space=sflag, size = 0x4, scoped, tag = 'scoped memory for tpu_custom_call.1']
    %8 = vsyncpa [#allocation4], 0
    // Predicated region
    $region2: #{tpu_custom_call.1} parent=1 // pred_check
      _
    $region3: #{tpu_custom_call.1} parent=1 // pred_check_branch
      %10 = sbr.rel (0) target = $region5
    $region4: #{tpu_custom_call.1} parent=1 // pred_region
      _
    $region5: #{tpu_custom_call.1} parent=1 // pred_fallthru
      _
    // Predicated region
    $region6: #{tpu_custom_call.1} parent=1 // pred_check
      _
    $region7: #{tpu_custom_call.1} parent=1 // pred_check_branch
      %12 = sbr.rel (0) target = $region9
    $region8: #{tpu_custom_call.1} parent=1 // pred_region
      %s14 = ssub.s32 2048, 2048
      %15 = vsyncadd [#allocation4], %s14
      %s16 = sshll.u32 [#allocation3], 4
      %s17 = int_to_ptr.vmem [resolvable:$true] %s16
      %22 = dma.hbm_to_vmem [thread:$0]  %s1, 2048, %s17, [#allocation4], 128, 128, 8
    $region9: #{tpu_custom_call.1} parent=1 // pred_fallthru
      _
    // Predicated region
    $region10: #{tpu_custom_call.1} parent=1 // pred_check
      _
    $region11: #{tpu_custom_call.1} parent=1 // pred_check_branch
      %24 = sbr.rel (0) target = $region13
    $region12: #{tpu_custom_call.1} parent=1 // pred_region
      %25 = dma.done [#allocation4], 2048
    $region13: #{tpu_custom_call.1} parent=1 // pred_fallthru
      _
    %s26 = sld [smem:[#allocation2]]
    %v27 = vld [vmem:[#allocation3] sm:$0xff]
    %v28 = vld [vmem:[#allocation3 + $0x8] sm:$0xff]
    %v29 = vld [vmem:[#allocation3 + $0x10] sm:$0xff]
    %v30 = vld [vmem:[#allocation3 + $0x18] sm:$0xff]
    %v31 = vld [vmem:[#allocation3 + $0x20] sm:$0xff]
    %v32 = vld [vmem:[#allocation3 + $0x28] sm:$0xff]
    %v33 = vld [vmem:[#allocation3 + $0x30] sm:$0xff]
    %v34 = vld [vmem:[#allocation3 + $0x38] sm:$0xff]
    %v35 = vld [vmem:[#allocation3 + $0x40] sm:$0xff]
    %v36 = vld [vmem:[#allocation3 + $0x48] sm:$0xff]
    %v37 = vld [vmem:[#allocation3 + $0x50] sm:$0xff]
    %v38 = vld [vmem:[#allocation3 + $0x58] sm:$0xff]
    %v39 = vld [vmem:[#allocation3 + $0x60] sm:$0xff]
    %v40 = vld [vmem:[#allocation3 + $0x68] sm:$0xff]
    %v41 = vld [vmem:[#allocation3 + $0x70] sm:$0xff]
    %v42 = vld [vmem:[#allocation3 + $0x78] sm:$0xff]
    %59 = vrot.lane.b32.xlu0 %v27, 1
    %v60 = vpop.permute.xlu0 %59
    %61 = vrot.lane.b32.xlu0 %v28, 1
    %v62 = vpop.permute.xlu0 %61
    %63 = vrot.lane.b32.xlu0 %v29, 1
    %v64 = vpop.permute.xlu0 %63
    %65 = vrot.lane.b32.xlu0 %v30, 1
    %v66 = vpop.permute.xlu0 %65
    %67 = vrot.lane.b32.xlu0 %v31, 1
    %v68 = vpop.permute.xlu0 %67
    %69 = vrot.lane.b32.xlu0 %v32, 1
    %v70 = vpop.permute.xlu0 %69
    %71 = vrot.lane.b32.xlu0 %v33, 1
    %v72 = vpop.permute.xlu0 %71
    %73 = vrot.lane.b32.xlu0 %v34, 1
    %v74 = vpop.permute.xlu0 %73
    %75 = vrot.lane.b32.xlu0 %v35, 1
    %v76 = vpop.permute.xlu0 %75
    %77 = vrot.lane.b32.xlu0 %v36, 1
    %v78 = vpop.permute.xlu0 %77
    %79 = vrot.lane.b32.xlu0 %v37, 1
    %v80 = vpop.permute.xlu0 %79
    %81 = vrot.lane.b32.xlu0 %v38, 1
    %v82 = vpop.permute.xlu0 %81
    %83 = vrot.lane.b32.xlu0 %v39, 1
    %v84 = vpop.permute.xlu0 %83
    %85 = vrot.lane.b32.xlu0 %v40, 1
    %v86 = vpop.permute.xlu0 %85
    %87 = vrot.lane.b32.xlu0 %v41, 1
    %v88 = vpop.permute.xlu0 %87
    %89 = vrot.lane.b32.xlu0 %v42, 1
    %v90 = vpop.permute.xlu0 %89
    %vm107 = vcmask 138248
    %108 = vst.msk [vmem:[%s2 + $0x2] sm:$0xff] %vm107, %v60
    %109 = vst.msk [vmem:[%s2 + $0xa] sm:$0xff] %vm107, %v62
    %110 = vst.msk [vmem:[%s2 + $0x1a] sm:$0xff] %vm107, %v64
    %111 = vst.msk [vmem:[%s2 + $0x22] sm:$0xff] %vm107, %v66
    %112 = vst.msk [vmem:[%s2 + $0x32] sm:$0xff] %vm107, %v68
    %113 = vst.msk [vmem:[%s2 + $0x3a] sm:$0xff] %vm107, %v70
    %114 = vst.msk [vmem:[%s2 + $0x4a] sm:$0xff] %vm107, %v72
    %115 = vst.msk [vmem:[%s2 + $0x52] sm:$0xff] %vm107, %v74
    %116 = vst.msk [vmem:[%s2 + $0x62] sm:$0xff] %vm107, %v76
    %117 = vst.msk [vmem:[%s2 + $0x6a] sm:$0xff] %vm107, %v78
    %118 = vst.msk [vmem:[%s2 + $0x7a] sm:$0xff] %vm107, %v80
    %119 = vst.msk [vmem:[%s2 + $0x82] sm:$0xff] %vm107, %v82
    %120 = vst.msk [vmem:[%s2 + $0x92] sm:$0xff] %vm107, %v84
    %121 = vst.msk [vmem:[%s2 + $0x9a] sm:$0xff] %vm107, %v86
    %122 = vst.msk [vmem:[%s2 + $0xaa] sm:$0xff] %vm107, %v88
    %123 = vst.msk [vmem:[%s2 + $0xb2] sm:$0xff] %vm107, %v90
    %v124 = vstv %s26
    %vm125 = vcmask 148480
    %126 = vst.msk [vmem:[%s2] sm:$0x3] %vm125, %v124
    %127 = vst.msk [vmem:[%s2 + $0x18] sm:$0x3] %vm125, %v124
    %128 = vst.msk [vmem:[%s2 + $0x30] sm:$0x3] %vm125, %v124
    %129 = vst.msk [vmem:[%s2 + $0x48] sm:$0x3] %vm125, %v124
    %130 = vst.msk [vmem:[%s2 + $0x60] sm:$0x3] %vm125, %v124
    %131 = vst.msk [vmem:[%s2 + $0x78] sm:$0x3] %vm125, %v124
    %132 = vst.msk [vmem:[%s2 + $0x90] sm:$0x3] %vm125, %v124
    %133 = vst.msk [vmem:[%s2 + $0xa8] sm:$0x3] %vm125, %v124
    %vm134 = vcmask 147456
    %135 = vst.msk [vmem:[%s2 + $0x12] sm:$0x1] %vm134, %v124
    %136 = vst.msk [vmem:[%s2 + $0x2a] sm:$0x1] %vm134, %v124
    %137 = vst.msk [vmem:[%s2 + $0x42] sm:$0x1] %vm134, %v124
    %138 = vst.msk [vmem:[%s2 + $0x5a] sm:$0x1] %vm134, %v124
    %139 = vst.msk [vmem:[%s2 + $0x72] sm:$0x1] %vm134, %v124
    %140 = vst.msk [vmem:[%s2 + $0x8a] sm:$0x1] %vm134, %v124
    %141 = vst.msk [vmem:[%s2 + $0xa2] sm:$0x1] %vm134, %v124
    %142 = vst.msk [vmem:[%s2 + $0xba] sm:$0x1] %vm134, %v124
    %vm143 = vcmask 7168
    %144 = vst.msk [vmem:[%s2 + $0x2] sm:$0xff] %vm143, %v124
    %145 = vst.msk [vmem:[%s2 + $0xa] sm:$0xff] %vm143, %v124
    %146 = vst.msk [vmem:[%s2 + $0x1a] sm:$0xff] %vm143, %v124
    %147 = vst.msk [vmem:[%s2 + $0x22] sm:$0xff] %vm143, %v124
    %148 = vst.msk [vmem:[%s2 + $0x32] sm:$0xff] %vm143, %v124
    %149 = vst.msk [vmem:[%s2 + $0x3a] sm:$0xff] %vm143, %v124
    %150 = vst.msk [vmem:[%s2 + $0x4a] sm:$0xff] %vm143, %v124
    %151 = vst.msk [vmem:[%s2 + $0x52] sm:$0xff] %vm143, %v124
    %152 = vst.msk [vmem:[%s2 + $0x62] sm:$0xff] %vm143, %v124
    %153 = vst.msk [vmem:[%s2 + $0x6a] sm:$0xff] %vm143, %v124
    %154 = vst.msk [vmem:[%s2 + $0x7a] sm:$0xff] %vm143, %v124
    %155 = vst.msk [vmem:[%s2 + $0x82] sm:$0xff] %vm143, %v124
    %156 = vst.msk [vmem:[%s2 + $0x92] sm:$0xff] %vm143, %v124
    %157 = vst.msk [vmem:[%s2 + $0x9a] sm:$0xff] %vm143, %v124
    %158 = vst.msk [vmem:[%s2 + $0xaa] sm:$0xff] %vm143, %v124
    %159 = vst.msk [vmem:[%s2 + $0xb2] sm:$0xff] %vm143, %v124
    %vm160 = vcmask 154760
    %161 = vst.msk [vmem:[%s2 + $0x2] sm:$0xff] %vm160, %v124
    %162 = vst.msk [vmem:[%s2 + $0xa] sm:$0xff] %vm160, %v124
    %163 = vst.msk [vmem:[%s2 + $0x1a] sm:$0xff] %vm160, %v124
    %164 = vst.msk [vmem:[%s2 + $0x22] sm:$0xff] %vm160, %v124
    %165 = vst.msk [vmem:[%s2 + $0x32] sm:$0xff] %vm160, %v124
    %166 = vst.msk [vmem:[%s2 + $0x3a] sm:$0xff] %vm160, %v124
    %167 = vst.msk [vmem:[%s2 + $0x4a] sm:$0xff] %vm160, %v124
    %168 = vst.msk [vmem:[%s2 + $0x52] sm:$0xff] %vm160, %v124
    %169 = vst.msk [vmem:[%s2 + $0x62] sm:$0xff] %vm160, %v124
    %170 = vst.msk [vmem:[%s2 + $0x6a] sm:$0xff] %vm160, %v124
    %171 = vst.msk [vmem:[%s2 + $0x7a] sm:$0xff] %vm160, %v124
    %172 = vst.msk [vmem:[%s2 + $0x82] sm:$0xff] %vm160, %v124
    %173 = vst.msk [vmem:[%s2 + $0x92] sm:$0xff] %vm160, %v124
    %174 = vst.msk [vmem:[%s2 + $0x9a] sm:$0xff] %vm160, %v124
    %175 = vst.msk [vmem:[%s2 + $0xaa] sm:$0xff] %vm160, %v124
    %176 = vst.msk [vmem:[%s2 + $0xb2] sm:$0xff] %vm160, %v124
    // Predicated region
    $region14: #{tpu_custom_call.1} parent=1 // pred_check
      _
    $region15: #{tpu_custom_call.1} parent=1 // pred_check_branch
      %178 = sbr.rel (0) target = $region17
    $region16: #{tpu_custom_call.1} parent=1 // pred_region
      _
    $region17: #{tpu_custom_call.1} parent=1 // pred_fallthru
      _
    // Predicated region
    $region18: #{tpu_custom_call.1} parent=1 // pred_check
      _
    $region19: #{tpu_custom_call.1} parent=1 // pred_check_branch
      %180 = sbr.rel (0) target = $region21
    $region20: #{tpu_custom_call.1} parent=1 // pred_region
      _
    $region21: #{tpu_custom_call.1} parent=1 // pred_fallthru
      _
    %181 = vsyncpa [#allocation4], 1

</llo_original>
